<compile_context>
chip_gen: v7x
topology: tpu7x:2x2x1
jax: 0.10.0
libtpu: 0.0.40
codegen_flags: <defaults>
</compile_context>

<pallas_src>
import functools

import jax
import jax.numpy as jnp
from jax.experimental import pallas as pl
from jax.experimental.pallas import tpu as pltpu

HIDDEN = 128
SUBLANE = 8


def _round_up(x, m):
    return (x + m - 1) // m * m


def decoder_kernel(z_ref, w1_ref, b1_ref, w2_ref, b2_ref, out_ref, *,
                   approx_sigmoid: bool):
    # fc1: h = relu(z @ W1 + b1) -- MXU matmul, f32 accumulation, f32 epilogue.
    x = z_ref[...].astype(w1_ref.dtype)
    h = jnp.dot(x, w1_ref[...], preferred_element_type=jnp.float32)
    h = jnp.maximum(h + b1_ref[...].astype(jnp.float32), 0.0)
    # fc2: out = sigmoid(h @ W2 + b2).
    o = jnp.dot(h.astype(w2_ref.dtype), w2_ref[...],
                preferred_element_type=jnp.float32)
    o = o + b2_ref[...].astype(jnp.float32)
    if approx_sigmoid:
        # exp + approximate reciprocal both run on the EUP slot -> keeps the
        # epilogue from becoming co-critical with DMA on v7x.
        out_ref[...] = pl.reciprocal(1.0 + jnp.exp(-o),
                                     approx=True).astype(out_ref.dtype)
    else:
        out_ref[...] = jax.nn.sigmoid(o).astype(out_ref.dtype)


def decoder_forward(z, w1, b1, w2, b2, *,
                    block_m=2048,
                    out_dtype=jnp.float32,
                    matmul_dtype=jnp.bfloat16,
                    approx_sigmoid=None,
                    vmem_budget_bytes=14 * 1024 * 1024):
    """z: [B, latent_dim]; w1: [latent_dim, 128]; b1: [128];
       w2: [128, output_dim]; b2: [output_dim]  ->  [B, output_dim].

    matmul_dtype=None keeps the caller's dtypes (exact f32 semantics);
    the default feeds the MXU bf16 with f32 accumulation + f32 epilogue.
    """
    B, latent_dim = z.shape
    hidden, output_dim = w2.shape
    assert w1.shape == (latent_dim, hidden) and hidden == HIDDEN
    assert b1.shape == (hidden,) and b2.shape == (output_dim,)

    # ---- dtype plumbing ----------------------------------------------------
    if matmul_dtype is not None:
        z = z.astype(matmul_dtype)
        w1 = w1.astype(matmul_dtype)
        w2 = w2.astype(matmul_dtype)
    b1_2d = b1.reshape(1, hidden).astype(jnp.float32)
    b2_2d = b2.reshape(1, output_dim).astype(jnp.float32)

    if approx_sigmoid is None:
        # Only approximate when the caller already opted into narrow outputs.
        approx_sigmoid = jnp.dtype(out_dtype) != jnp.dtype(jnp.float32)

    out_itemsize = jnp.dtype(out_dtype).itemsize
    z_itemsize = z.dtype.itemsize

    # ---- tile-size derivation (VMEM-budgeted, v5e-safe) ---------------------
    # Resident (constant index_map) blocks; assume worst-case double buffering
    # in case the Buffered(1) hint is unavailable on this runtime.
    resident = 2 * (w1.size * w1.dtype.itemsize + w2.size * w2.dtype.itemsize
                    + (b1_2d.size + b2_2d.size) * 4)
    stream_per_row = 2 * (latent_dim * z_itemsize + output_dim * out_itemsize)
    tm_cap = max(vmem_budget_bytes - resident,
                 stream_per_row * SUBLANE) // stream_per_row
    tm_cap = max(SUBLANE, (tm_cap // SUBLANE) * SUBLANE)

    b_pad = _round_up(B, SUBLANE)
    tm = max(SUBLANE, min(block_m, tm_cap, b_pad))
    tm = (tm // SUBLANE) * SUBLANE

    if B < tm and B % SUBLANE != 0:
        # Small ragged batch: single full-array block -> no padding, no slice.
        tm, b_pad = B, B
    else:
        # Megacore: split into >=2 tiles when that adds no extra batch padding
        # (keeps both v7x TensorCores busy without forcing a post-slice).
        if 2 * tm > b_pad and b_pad >= 2 * SUBLANE:
            half = _round_up((b_pad + 1) // 2, SUBLANE)
            if _round_up(b_pad, half) == b_pad:
                tm = half
        b_pad = _round_up(b_pad, tm)
    grid = (b_pad // tm,)

    if b_pad != B:
        z = jnp.pad(z, ((0, b_pad - B), (0, 0)))

    # ---- cost hint ----------------------------------------------------------
    flops = 2 * b_pad * (latent_dim * hidden + hidden * output_dim)
    bytes_accessed = (z.size * z_itemsize
                      + w1.size * w1.dtype.itemsize
                      + w2.size * w2.dtype.itemsize
                      + (b1_2d.size + b2_2d.size) * 4
                      + b_pad * output_dim * out_itemsize)
    cost = pl.CostEstimate(flops=flops,
                           transcendentals=2 * b_pad * output_dim,  # exp + rcp
                           bytes_accessed=bytes_accessed)

    kernel = functools.partial(decoder_kernel, approx_sigmoid=approx_sigmoid)

    def _run(single_buffer_weights):
        wkw = ({"pipeline_mode": pl.Buffered(1)}
               if single_buffer_weights else {})
        in_specs = [
            # Streaming activations: one batch tile per grid step.
            pl.BlockSpec((tm, latent_dim), lambda i: (i, 0)),
            # Weights / biases: constant index_map -> fetched once, resident.
            pl.BlockSpec((latent_dim, hidden), lambda i: (0, 0), **wkw),
            pl.BlockSpec((1, hidden), lambda i: (0, 0), **wkw),
            pl.BlockSpec((hidden, output_dim), lambda i: (0, 0), **wkw),
            pl.BlockSpec((1, output_dim), lambda i: (0, 0), **wkw),
        ]
        return pl.pallas_call(
            kernel,
            out_shape=jax.ShapeDtypeStruct((b_pad, output_dim), out_dtype),
            grid=grid,
            in_specs=in_specs,
            # Last dim == full array dim: no lane padding, no post-slice; at
            # most one masked vst per row when output_dim % 128 != 0.
            out_specs=pl.BlockSpec((tm, output_dim), lambda i: (i, 0)),
            compiler_params=pltpu.CompilerParams(
                dimension_semantics=("parallel",),
                vmem_limit_bytes=32 * 1024 * 1024),
            cost_estimate=cost,
        )(z, w1, b1_2d, w2, b2_2d)

    try:
        out = _run(True)
    except Exception:
        # Fallback if this runtime rejects pipeline_mode=pl.Buffered(1).
        out = _run(False)

    # Only slice when batch padding was actually required.
    return out if b_pad == B else out[:B]


def init_decoder_params(key, latent_dim, output_dim, hidden=HIDDEN):
    # Mimic nn.Linear's U(-1/sqrt(fan_in), 1/sqrt(fan_in)) init; weights stored
    # pre-transposed as [in, out].
    k1, k2, k3, k4 = jax.random.split(key, 4)
    bound1 = 1.0 / jnp.sqrt(latent_dim)
    bound2 = 1.0 / jnp.sqrt(hidden)
    w1 = jax.random.uniform(k1, (latent_dim, hidden), jnp.float32, -bound1, bound1)
    b1 = jax.random.uniform(k2, (hidden,), jnp.float32, -bound1, bound1)
    w2 = jax.random.uniform(k3, (hidden, output_dim), jnp.float32, -bound2, bound2)
    b2 = jax.random.uniform(k4, (output_dim,), jnp.float32, -bound2, bound2)
    return w1, b1, w2, b2


def _reference(z, w1, b1, w2, b2):
    h = jnp.maximum(z @ w1 + b1[None, :], 0.0)
    return jax.nn.sigmoid(h @ w2 + b2[None, :])


if __name__ == "__main__":
    latent_dim, output_dim = 16, 32
    key = jax.random.PRNGKey(0)
    kz, kp = jax.random.split(key)
    w1, b1, w2, b2 = init_decoder_params(kp, latent_dim, output_dim)

    z = jax.random.normal(kz, (8, latent_dim), jnp.float32)
    ref = _reference(z, w1, b1, w2, b2)

    # 1) Exact f32 path (matches the PyTorch forward numerics).
    out = jax.block_until_ready(
        decoder_forward(z, w1, b1, w2, b2, matmul_dtype=None))
    assert out.shape == (8, output_dim) and out.dtype == jnp.float32
    assert jnp.allclose(out, ref, atol=1e-5, rtol=1e-5)

    # 2) Default perf path: bf16-fed MXU, f32 accumulation + exact f32 epilogue.
    out_def = jax.block_until_ready(decoder_forward(z, w1, b1, w2, b2))
    assert jnp.allclose(out_def, ref, atol=3e-2, rtol=0)

    # 3) Narrow-output path: bf16 store (halves the dominant HBM stream) and
    #    EUP approx-reciprocal sigmoid.
    out_bf = jax.block_until_ready(
        decoder_forward(z, w1, b1, w2, b2, out_dtype=jnp.bfloat16))
    assert out_bf.dtype == jnp.bfloat16
    assert jnp.allclose(out_bf.astype(jnp.float32), ref, atol=5e-2, rtol=0)

    # 4) Multi-tile grid (megacore split), no padding and no post-kernel slice.
    z64 = jax.random.normal(jax.random.PRNGKey(1), (64, latent_dim), jnp.float32)
    out64 = jax.block_until_ready(decoder_forward(z64, w1, b1, w2, b2))
    assert out64.shape == (64, output_dim)
    assert jnp.allclose(out64, _reference(z64, w1, b1, w2, b2), atol=3e-2, rtol=0)

    # 5) Ragged batch (not a multiple of 8): single full-array block, no pad.
    z5 = jax.random.normal(jax.random.PRNGKey(2), (5, latent_dim), jnp.float32)
    out5 = jax.block_until_ready(
        decoder_forward(z5, w1, b1, w2, b2, matmul_dtype=None))
    assert out5.shape == (5, output_dim)
    assert jnp.allclose(out5, _reference(z5, w1, b1, w2, b2), atol=1e-5, rtol=1e-5)

    # 6) Batch-padding path: batch not a multiple of a small block_m.
    z40 = jax.random.normal(jax.random.PRNGKey(3), (40, latent_dim), jnp.float32)
    out40 = jax.block_until_ready(
        decoder_forward(z40, w1, b1, w2, b2, block_m=16, matmul_dtype=None))
    assert out40.shape == (40, output_dim)
    assert jnp.allclose(out40, _reference(z40, w1, b1, w2, b2), atol=1e-5, rtol=1e-5)

    print("KERNEL_OK")
</pallas_src>

<mosaic_0001>
module attributes {stable_mosaic.version = 11 : i64} {
  func.func @decoder_kernel(%arg0: i32, %arg1: memref<8x16xf32, #tpu.memory_space<vmem>>, %arg2: memref<16x128xf32, #tpu.memory_space<vmem>>, %arg3: memref<1x128xf32, #tpu.memory_space<vmem>>, %arg4: memref<128x32xf32, #tpu.memory_space<vmem>>, %arg5: memref<1x32xf32, #tpu.memory_space<vmem>>, %arg6: memref<8x32xf32, #tpu.memory_space<vmem>>) attributes {dimension_semantics = [#tpu.dimension_semantics<parallel>], iteration_bounds = array<i64: 1>, scalar_prefetch = 0 : i64, scratch_operands = 0 : i64, tpu.core_type = #tpu.core_type<tc>, window_params = [{transform_indices = @transform_0, window_bounds = array<i64: 8, 16>}, {pipeline_mode = #tpu.pipeline_mode<synchronous>, transform_indices = @transform_1, window_bounds = array<i64: 16, 128>}, {pipeline_mode = #tpu.pipeline_mode<synchronous>, transform_indices = @transform_2, window_bounds = array<i64: 1, 128>}, {pipeline_mode = #tpu.pipeline_mode<synchronous>, transform_indices = @transform_3, window_bounds = array<i64: 128, 32>}, {pipeline_mode = #tpu.pipeline_mode<synchronous>, transform_indices = @transform_4, window_bounds = array<i64: 1, 32>}, {transform_indices = @transform_5, window_bounds = array<i64: 8, 32>}]} {
    %c0 = arith.constant 0 : index
    %c0_0 = arith.constant 0 : index
    %0 = vector.load %arg1[%c0, %c0_0] : memref<8x16xf32, #tpu.memory_space<vmem>>, vector<8x16xf32>
    %c0_1 = arith.constant 0 : index
    %c0_2 = arith.constant 0 : index
    %1 = vector.load %arg2[%c0_1, %c0_2] : memref<16x128xf32, #tpu.memory_space<vmem>>, vector<16x128xf32>
    %cst = arith.constant dense<0.000000e+00> : vector<8x128xf32>
    %2 = tpu.matmul %0, %1, %cst {dimension_numbers = #tpu.dot_dimension_numbers<[1], [0], [0], [1], [0, 0, 1, 1], [], []>} : vector<8x16xf32>, vector<16x128xf32>, vector<8x128xf32> -> vector<8x128xf32>
    %c0_3 = arith.constant 0 : index
    %c0_4 = arith.constant 0 : index
    %3 = vector.load %arg3[%c0_3, %c0_4] : memref<1x128xf32, #tpu.memory_space<vmem>>, vector<1x128xf32>
    %4 = vector.broadcast %3 : vector<1x128xf32> to vector<8x128xf32>
    %5 = arith.addf %2, %4 : vector<8x128xf32>
    %cst_5 = arith.constant 0.000000e+00 : f32
    %6 = vector.broadcast %cst_5 : f32 to vector<8x128xf32>
    %7 = arith.maximumf %5, %6 : vector<8x128xf32>
    %c0_6 = arith.constant 0 : index
    %c0_7 = arith.constant 0 : index
    %8 = vector.load %arg4[%c0_6, %c0_7] : memref<128x32xf32, #tpu.memory_space<vmem>>, vector<128x32xf32>
    %cst_8 = arith.constant dense<0.000000e+00> : vector<8x32xf32>
    %9 = tpu.matmul %7, %8, %cst_8 {dimension_numbers = #tpu.dot_dimension_numbers<[1], [0], [0], [1], [0, 0, 1, 1], [], []>} : vector<8x128xf32>, vector<128x32xf32>, vector<8x32xf32> -> vector<8x32xf32>
    %c0_9 = arith.constant 0 : index
    %c0_10 = arith.constant 0 : index
    %10 = vector.load %arg5[%c0_9, %c0_10] : memref<1x32xf32, #tpu.memory_space<vmem>>, vector<1x32xf32>
    %11 = vector.broadcast %10 : vector<1x32xf32> to vector<8x32xf32>
    %12 = arith.addf %9, %11 : vector<8x32xf32>
    %13 = arith.negf %12 : vector<8x32xf32>
    %14 = math.exp %13 : vector<8x32xf32>
    %cst_11 = arith.constant 1.000000e+00 : f32
    %15 = vector.broadcast %cst_11 : f32 to vector<8x32xf32>
    %16 = arith.addf %15, %14 : vector<8x32xf32>
    %17 = arith.divf %15, %16 : vector<8x32xf32>
    %c0_12 = arith.constant 0 : index
    %c0_13 = arith.constant 0 : index
    %18 = vector.load %arg6[%c0_12, %c0_13] : memref<8x32xf32, #tpu.memory_space<vmem>>, vector<8x32xf32>
    tpu.vector_store %arg6[%c0_12, %c0_13], %17 {strides = array<i32>} : memref<8x32xf32, #tpu.memory_space<vmem>>, vector<8x32xf32>,
    return
  }
  func.func @transform_0(%arg0: i32) -> (i32, i32) {
    %c0_i32 = arith.constant 0 : i32
    %c0_i32_0 = arith.constant 0 : i32
    return %arg0, %c0_i32 : i32, i32
  }
  func.func @transform_1(%arg0: i32) -> (i32, i32) {
    %c0_i32 = arith.constant 0 : i32
    %c0_i32_0 = arith.constant 0 : i32
    %c0_i32_1 = arith.constant 0 : i32
    return %c0_i32, %c0_i32_0 : i32, i32
  }
  func.func @transform_2(%arg0: i32) -> (i32, i32) {
    %c0_i32 = arith.constant 0 : i32
    %c0_i32_0 = arith.constant 0 : i32
    %c0_i32_1 = arith.constant 0 : i32
    return %c0_i32, %c0_i32_0 : i32, i32
  }
  func.func @transform_3(%arg0: i32) -> (i32, i32) {
    %c0_i32 = arith.constant 0 : i32
    %c0_i32_0 = arith.constant 0 : i32
    %c0_i32_1 = arith.constant 0 : i32
    return %c0_i32, %c0_i32_0 : i32, i32
  }
  func.func @transform_4(%arg0: i32) -> (i32, i32) {
    %c0_i32 = arith.constant 0 : i32
    %c0_i32_0 = arith.constant 0 : i32
    %c0_i32_1 = arith.constant 0 : i32
    return %c0_i32, %c0_i32_0 : i32, i32
  }
  func.func @transform_5(%arg0: i32) -> (i32, i32) {
    %c0_i32 = arith.constant 0 : i32
    %c0_i32_0 = arith.constant 0 : i32
    return %arg0, %c0_i32 : i32, i32
  }
}

module attributes {stable_mosaic.version = 11 : i64} {
  func.func @decoder_kernel(%arg0: i32, %arg1: memref<8x16xf32, #tpu.memory_space<vmem>>, %arg2: memref<16x128xf32, #tpu.memory_space<vmem>>, %arg3: memref<1x128xf32, #tpu.memory_space<vmem>>, %arg4: memref<128x32xf32, #tpu.memory_space<vmem>>, %arg5: memref<1x32xf32, #tpu.memory_space<vmem>>, %arg6: memref<8x32xf32, #tpu.memory_space<vmem>>) attributes {dimension_semantics = [#tpu.dimension_semantics<parallel>], iteration_bounds = array<i64: 1>, scalar_prefetch = 0 : i64, scratch_operands = 0 : i64, tpu.core_type = #tpu.core_type<tc>, window_params = [{transform_indices = @transform_0, window_bounds = array<i64: 8, 16>}, {pipeline_mode = #tpu.pipeline_mode<synchronous>, transform_indices = @transform_1, window_bounds = array<i64: 16, 128>}, {pipeline_mode = #tpu.pipeline_mode<synchronous>, transform_indices = @transform_2, window_bounds = array<i64: 1, 128>}, {pipeline_mode = #tpu.pipeline_mode<synchronous>, transform_indices = @transform_3, window_bounds = array<i64: 128, 32>}, {pipeline_mode = #tpu.pipeline_mode<synchronous>, transform_indices = @transform_4, window_bounds = array<i64: 1, 32>}, {transform_indices = @transform_5, window_bounds = array<i64: 8, 32>}]} {
    %c0 = arith.constant 0 : index
    %c0_0 = arith.constant 0 : index
    %0 = vector.load %arg1[%c0, %c0_0] : memref<8x16xf32, #tpu.memory_space<vmem>>, vector<8x16xf32>
    %c0_1 = arith.constant 0 : index
    %c0_2 = arith.constant 0 : index
    %1 = vector.load %arg2[%c0_1, %c0_2] : memref<16x128xf32, #tpu.memory_space<vmem>>, vector<16x128xf32>
    %cst = arith.constant dense<0.000000e+00> : vector<8x128xf32>
    %2 = tpu.matmul %0, %1, %cst {dimension_numbers = #tpu.dot_dimension_numbers<[1], [0], [0], [1], [0, 0, 1, 1], [], []>} : vector<8x16xf32>, vector<16x128xf32>, vector<8x128xf32> -> vector<8x128xf32>
    %c0_3 = arith.constant 0 : index
    %c0_4 = arith.constant 0 : index
    %3 = vector.load %arg3[%c0_3, %c0_4] : memref<1x128xf32, #tpu.memory_space<vmem>>, vector<1x128xf32>
    %4 = vector.broadcast %3 : vector<1x128xf32> to vector<8x128xf32>
    %5 = arith.addf %2, %4 : vector<8x128xf32>
    %cst_5 = arith.constant 0.000000e+00 : f32
    %6 = vector.broadcast %cst_5 : f32 to vector<8x128xf32>
    %7 = arith.maximumf %5, %6 : vector<8x128xf32>
    %c0_6 = arith.constant 0 : index
    %c0_7 = arith.constant 0 : index
    %8 = vector.load %arg4[%c0_6, %c0_7] : memref<128x32xf32, #tpu.memory_space<vmem>>, vector<128x32xf32>
    %cst_8 = arith.constant dense<0.000000e+00> : vector<8x32xf32>
    %9 = tpu.matmul %7, %8, %cst_8 {dimension_numbers = #tpu.dot_dimension_numbers<[1], [0], [0], [1], [0, 0, 1, 1], [], []>} : vector<8x128xf32>, vector<128x32xf32>, vector<8x32xf32> -> vector<8x32xf32>
    %c0_9 = arith.constant 0 : index
    %c0_10 = arith.constant 0 : index
    %10 = vector.load %arg5[%c0_9, %c0_10] : memref<1x32xf32, #tpu.memory_space<vmem>>, vector<1x32xf32>
    %11 = vector.broadcast %10 : vector<1x32xf32> to vector<8x32xf32>
    %12 = arith.addf %9, %11 : vector<8x32xf32>
    %13 = arith.negf %12 : vector<8x32xf32>
    %14 = math.exp %13 : vector<8x32xf32>
    %cst_11 = arith.constant 1.000000e+00 : f32
    %15 = vector.broadcast %cst_11 : f32 to vector<8x32xf32>
    %16 = arith.addf %15, %14 : vector<8x32xf32>
    %17 = arith.divf %15, %16 : vector<8x32xf32>
    %c0_12 = arith.constant 0 : index
    %c0_13 = arith.constant 0 : index
    %18 = vector.load %arg6[%c0_12, %c0_13] : memref<8x32xf32, #tpu.memory_space<vmem>>, vector<8x32xf32>
    tpu.vector_store %arg6[%c0_12, %c0_13], %17 {strides = array<i32>} : memref<8x32xf32, #tpu.memory_space<vmem>>, vector<8x32xf32>,
    return
  }
  func.func @transform_0(%arg0: i32) -> (i32, i32) {
    %c0_i32 = arith.constant 0 : i32
    %c0_i32_0 = arith.constant 0 : i32
    return %arg0, %c0_i32 : i32, i32
  }
  func.func @transform_1(%arg0: i32) -> (i32, i32) {
    %c0_i32 = arith.constant 0 : i32
    %c0_i32_0 = arith.constant 0 : i32
    %c0_i32_1 = arith.constant 0 : i32
    return %c0_i32, %c0_i32_0 : i32, i32
  }
  func.func @transform_2(%arg0: i32) -> (i32, i32) {
    %c0_i32 = arith.constant 0 : i32
    %c0_i32_0 = arith.constant 0 : i32
    %c0_i32_1 = arith.constant 0 : i32
    return %c0_i32, %c0_i32_0 : i32, i32
  }
  func.func @transform_3(%arg0: i32) -> (i32, i32) {
    %c0_i32 = arith.constant 0 : i32
    %c0_i32_0 = arith.constant 0 : i32
    %c0_i32_1 = arith.constant 0 : i32
    return %c0_i32, %c0_i32_0 : i32, i32
  }
  func.func @transform_4(%arg0: i32) -> (i32, i32) {
    %c0_i32 = arith.constant 0 : i32
    %c0_i32_0 = arith.constant 0 : i32
    %c0_i32_1 = arith.constant 0 : i32
    return %c0_i32, %c0_i32_0 : i32, i32
  }
  func.func @transform_5(%arg0: i32) -> (i32, i32) {
    %c0_i32 = arith.constant 0 : i32
    %c0_i32_0 = arith.constant 0 : i32
    return %arg0, %c0_i32 : i32, i32
  }
}

</mosaic_0001>

<llo_original>
// kernel: tpu_custom_call.1
$region0: #{tpu_custom_call.1}
  #allocation0 [shape = 'u32[]', space=smem, size = 0x4, offset = 0x4, fixed_abs, tag = 'smem constant byte address 0x4 - core index']
  #allocation1 [shape = 'u32[144,128]{1,0:T(1,128)}', space=vmem, size = 0x12000, scoped, tag = 'internal scratch']
  %s0 = inlined_call_operand.vmem [shape: f32[8,16], index: 0, kind: input, shape index: {}]
  %s1 = inlined_call_operand.vmem [shape: f32[16,128], index: 1, kind: input, shape index: {}]
  %s2 = inlined_call_operand.vmem [shape: f32[1,128], index: 2, kind: input, shape index: {}]
  %s3 = inlined_call_operand.vmem [shape: f32[128,32], index: 3, kind: input, shape index: {}]
  %s4 = inlined_call_operand.vmem [shape: f32[1,32], index: 4, kind: input, shape index: {}]
  %s5 = inlined_call_operand.hbm [shape: f32[8,32], index: 5, kind: output, shape index: {}]
  %s6 = sld [smem:[#allocation0]]
  $region30: #{tpu_custom_call.1} parent=0
    _
  %s8 = ssub.s32 1, %s6
  %s9 = scalar_select 0, %s8, %s6
  $region1: #{tpu_custom_call.1} parent=0
    #allocation2 [shape = 'u8[4096]{0}', space=vmem, size = 0x1000, scoped, tag = 'output window, operand 0, single buffered']
    #allocation3 [shape = 's32[1]{0}', space=sflag, size = 0x4, scoped, tag = 'scoped memory for tpu_custom_call.1']
    %10 = vsyncpa [#allocation3], 0
    // Predicated region
    $region2: #{tpu_custom_call.1} parent=1 // pred_check
      _
    $region3: #{tpu_custom_call.1} parent=1 // pred_check_branch
      %12 = sbr.rel (0) target = $region5
    $region4: #{tpu_custom_call.1} parent=1 // pred_region
      _
    $region5: #{tpu_custom_call.1} parent=1 // pred_fallthru
      _
    // Predicated region
    $region6: #{tpu_custom_call.1} parent=1 // pred_check
      _
    $region7: #{tpu_custom_call.1} parent=1 // pred_check_branch
      %14 = sbr.rel (0) target = $region9
    $region8: #{tpu_custom_call.1} parent=1 // pred_region
      _
    $region9: #{tpu_custom_call.1} parent=1 // pred_fallthru
      _
    // Predicated region
    $region10: #{tpu_custom_call.1} parent=1 // pred_check
      _
    $region11: #{tpu_custom_call.1} parent=1 // pred_check_branch
      %16 = sbr.rel (0) target = $region13
    $region12: #{tpu_custom_call.1} parent=1 // pred_region
      _
    $region13: #{tpu_custom_call.1} parent=1 // pred_fallthru
      _
    // Predicated region
    $region14: #{tpu_custom_call.1} parent=1 // pred_check
      _
    $region15: #{tpu_custom_call.1} parent=1 // pred_check_branch
      %18 = sbr.rel (0) target = $region17
    $region16: #{tpu_custom_call.1} parent=1 // pred_region
      _
    $region17: #{tpu_custom_call.1} parent=1 // pred_fallthru
      _
    // Predicated region
    $region18: #{tpu_custom_call.1} parent=1 // pred_check
      _
    $region19: #{tpu_custom_call.1} parent=1 // pred_check_branch
      %20 = sbr.rel (0) target = $region21
    $region20: #{tpu_custom_call.1} parent=1 // pred_region
      _
    $region21: #{tpu_custom_call.1} parent=1 // pred_fallthru
      _
    %v21 = vld [vmem:[%s0] sm:$0xff]
    %v22 = vld [vmem:[%s1] sm:$0xff]
    %v23 = vld [vmem:[%s1 + $0x8] sm:$0xff]
    %v24 = vld [vmem:[%s2] sm:$0x1]
    %v26 = vlaneseq
    %v27 = vshrl.u32 %v26, 7
    %v28 = vsub.s32 0, %v27
    %v29 = vrot.slane %v24, %v28
    %vm31 = vcmask 130048
    %v33 = vsel %vm31, %v21, 0
    %35 = vmatprep.subr.mxu0 0.0
    %36 = vmatpush1.msra.mxu0 %v22
    %37 = vmatprep.subr.mxu0 0.0
    %38 = vmatpush1.msra.mxu0 %v23
    %39 = vmatprep.subr.mxu0 0.0
    %40 = vmatpush1.msra.mxu0 0.0
    %41 = vmatprep.subr.mxu0 0.0
    %42 = vmatpush1.msra.mxu0 0.0
    %43 = vmatprep.subr.mxu0 0.0
    %44 = vmatpush1.msra.mxu0 0.0
    %45 = vmatprep.subr.mxu0 0.0
    %46 = vmatpush1.msra.mxu0 0.0
    %47 = vmatprep.subr.mxu0 0.0
    %48 = vmatpush1.msra.mxu0 0.0
    %49 = vmatprep.subr.mxu0 0.0
    %50 = vmatpush1.msra.mxu0 0.0
    %51 = vmatprep.subr.mxu0 0.0
    %52 = vmatpush1.msra.mxu0 0.0
    %53 = vmatprep.subr.mxu0 0.0
    %54 = vmatpush1.msra.mxu0 0.0
    %55 = vmatprep.subr.mxu0 0.0
    %56 = vmatpush1.msra.mxu0 0.0
    %57 = vmatprep.subr.mxu0 0.0
    %58 = vmatpush1.msra.mxu0 0.0
    %59 = vmatprep.subr.mxu0 0.0
    %60 = vmatpush1.msra.mxu0 0.0
    %61 = vmatprep.subr.mxu0 0.0
    %62 = vmatpush1.msra.mxu0 0.0
    %63 = vmatprep.subr.mxu0 0.0
    %64 = vmatpush1.msra.mxu0 0.0
    %65 = vmatprep.subr.mxu0 0.0
    %66 = vmatpush1.msra.mxu0 0.0
    %67 = vmatprep.subr.mxu0 0.0
    %68 = vmatpush1.msra.mxu0 0.0
    %69 = vmatprep.subr.mxu0 0.0
    %70 = vmatpush1.msra.mxu0 0.0
    %71 = vmatprep.subr.mxu0 0.0
    %72 = vmatpush1.msra.mxu0 0.0
    %73 = vmatprep.subr.mxu0 0.0
    %74 = vmatpush1.msra.mxu0 0.0
    %75 = vmatprep.subr.mxu0 0.0
    %76 = vmatpush1.msra.mxu0 0.0
    %77 = vmatprep.subr.mxu0 0.0
    %78 = vmatpush1.msra.mxu0 0.0
    %79 = vmatprep.subr.mxu0 0.0
    %80 = vmatpush1.msra.mxu0 0.0
    %81 = vmatprep.subr.mxu0 0.0
    %82 = vmatpush1.msra.mxu0 0.0
    %83 = vmatprep.subr.mxu0 0.0
    %84 = vmatpush1.msra.mxu0 0.0
    %85 = vmatprep.subr.mxu0 0.0
    %86 = vmatpush1.msra.mxu0 0.0
    %87 = vmatprep.subr.mxu0 0.0
    %88 = vmatpush1.msra.mxu0 0.0
    %89 = vmatprep.subr.mxu0 0.0
    %90 = vmatpush1.msra.mxu0 0.0
    %91 = vmatprep.subr.mxu0 0.0
    %92 = vmatpush1.msra.mxu0 0.0
    %93 = vmatprep.subr.mxu0 0.0
    %94 = vmatpush1.msra.mxu0 0.0
    %95 = vmatprep.subr.mxu0 0.0
    %96 = vmatpush1.msra.mxu0 0.0
    %97 = vmatprep.subr.mxu0 0.0
    %98 = vmatpush1.msra.mxu0 0.0
    %99 = vmatprep.mubr.f32.mxu0 0.0
    %100 = vmatmul.mubr.f32.gmra.mrb[0].mxu0 %v33
    %v101 = vpop.f32.mrb[0].mxu0
    %v102 = vadd.f32 %v29, %v101
    %v103 = vpop.f32.mrb[0].mxu0
    %104 = vdwg.mxu0
    %v105 = vmax.f32 %v102, 0.0
    %v106 = vld [vmem:[%s3] sm:$0xff]
    %v107 = vld [vmem:[%s3 + $0x8] sm:$0xff]
    %v108 = vld [vmem:[%s3 + $0x10] sm:$0xff]
    %v109 = vld [vmem:[%s3 + $0x18] sm:$0xff]
    %v110 = vld [vmem:[%s3 + $0x20] sm:$0xff]
    %v111 = vld [vmem:[%s3 + $0x28] sm:$0xff]
    %v112 = vld [vmem:[%s3 + $0x30] sm:$0xff]
    %v113 = vld [vmem:[%s3 + $0x38] sm:$0xff]
    %v114 = vld [vmem:[%s3 + $0x40] sm:$0xff]
    %v115 = vld [vmem:[%s3 + $0x48] sm:$0xff]
    %v116 = vld [vmem:[%s3 + $0x50] sm:$0xff]
    %v117 = vld [vmem:[%s3 + $0x58] sm:$0xff]
    %v118 = vld [vmem:[%s3 + $0x60] sm:$0xff]
    %v119 = vld [vmem:[%s3 + $0x68] sm:$0xff]
    %v120 = vld [vmem:[%s3 + $0x70] sm:$0xff]
    %v121 = vld [vmem:[%s3 + $0x78] sm:$0xff]
    %v122 = vld [vmem:[%s4] sm:$0x1]
    %v124 = vlaneseq
    %v125 = vshrl.u32 %v124, 7
    %v126 = vsub.s32 0, %v125
    %v127 = vrot.slane %v122, %v126
    %129 = vmatprep.subr.mxu0 0.0
    %130 = vmatpush1.msra.mxu0 %v106
    %131 = vmatprep.subr.mxu0 0.0
    %132 = vmatpush1.msra.mxu0 %v107
    %133 = vmatprep.subr.mxu0 0.0
    %134 = vmatpush1.msra.mxu0 %v108
    %135 = vmatprep.subr.mxu0 0.0
    %136 = vmatpush1.msra.mxu0 %v109
    %137 = vmatprep.subr.mxu0 0.0
    %138 = vmatpush1.msra.mxu0 %v110
    %139 = vmatprep.subr.mxu0 0.0
    %140 = vmatpush1.msra.mxu0 %v111
    %141 = vmatprep.subr.mxu0 0.0
    %142 = vmatpush1.msra.mxu0 %v112
    %143 = vmatprep.subr.mxu0 0.0
    %144 = vmatpush1.msra.mxu0 %v113
    %145 = vmatprep.subr.mxu0 0.0
    %146 = vmatpush1.msra.mxu0 %v114
    %147 = vmatprep.subr.mxu0 0.0
    %148 = vmatpush1.msra.mxu0 %v115
    %149 = vmatprep.subr.mxu0 0.0
    %150 = vmatpush1.msra.mxu0 %v116
    %151 = vmatprep.subr.mxu0 0.0
    %152 = vmatpush1.msra.mxu0 %v117
    %153 = vmatprep.subr.mxu0 0.0
    %154 = vmatpush1.msra.mxu0 %v118
    %155 = vmatprep.subr.mxu0 0.0
    %156 = vmatpush1.msra.mxu0 %v119
    %157 = vmatprep.subr.mxu0 0.0
    %158 = vmatpush1.msra.mxu0 %v120
    %159 = vmatprep.subr.mxu0 0.0
    %160 = vmatpush1.msra.mxu0 %v121
    %161 = vmatprep.subr.mxu0 0.0
    %162 = vmatpush1.msra.mxu0 0.0
    %163 = vmatprep.subr.mxu0 0.0
    %164 = vmatpush1.msra.mxu0 0.0
    %165 = vmatprep.subr.mxu0 0.0
    %166 = vmatpush1.msra.mxu0 0.0
    %167 = vmatprep.subr.mxu0 0.0
    %168 = vmatpush1.msra.mxu0 0.0
    %169 = vmatprep.subr.mxu0 0.0
    %170 = vmatpush1.msra.mxu0 0.0
    %171 = vmatprep.subr.mxu0 0.0
    %172 = vmatpush1.msra.mxu0 0.0
    %173 = vmatprep.subr.mxu0 0.0
    %174 = vmatpush1.msra.mxu0 0.0
    %175 = vmatprep.subr.mxu0 0.0
    %176 = vmatpush1.msra.mxu0 0.0
    %177 = vmatprep.subr.mxu0 0.0
    %178 = vmatpush1.msra.mxu0 0.0
    %179 = vmatprep.subr.mxu0 0.0
    %180 = vmatpush1.msra.mxu0 0.0
    %181 = vmatprep.subr.mxu0 0.0
    %182 = vmatpush1.msra.mxu0 0.0
    %183 = vmatprep.subr.mxu0 0.0
    %184 = vmatpush1.msra.mxu0 0.0
    %185 = vmatprep.subr.mxu0 0.0
    %186 = vmatpush1.msra.mxu0 0.0
    %187 = vmatprep.subr.mxu0 0.0
    %188 = vmatpush1.msra.mxu0 0.0
    %189 = vmatprep.subr.mxu0 0.0
    %190 = vmatpush1.msra.mxu0 0.0
    %191 = vmatprep.subr.mxu0 0.0
    %192 = vmatpush1.msra.mxu0 0.0
    %193 = vmatprep.mubr.f32.mxu0 0.0
    %194 = vmatmul.mubr.f32.gmra.mrb[0].mxu0 %v105
    %v195 = vpop.f32.mrb[0].mxu0
    %v196 = vadd.f32 %v127, %v195
    %v197 = vpop.f32.mrb[0].mxu0
    %198 = vdwg.mxu0
    %v199 = vxor.u32 %v196, 2147483648
    %v200 = vmul.f32 %v199, 1.442695
    %v201 = vpow.pop %v200
    %v202 = vadd.f32 %v201, 1.0
    %v203 = vrcp.pop %v202
    %v204 = vmul.f32 1.0, %v203
    %vm205 = vcmask 261120
    %206 = vst.msk [vmem:[#allocation2] sm:$0xff] %vm205, %v204
    // Predicated region
    $region22: #{tpu_custom_call.1} parent=1 // pred_check
      _
    $region23: #{tpu_custom_call.1} parent=1 // pred_check_branch
      %208 = sbr.rel (0) target = $region25
    $region24: #{tpu_custom_call.1} parent=1 // pred_region
      %s210 = ssub.s32 128, 128
      %211 = vsyncadd [#allocation3], %s210
      %s213 = sshll.u32 [#allocation2], 4
      %s214 = int_to_ptr.vmem [resolvable:$true] %s213
      %216 = dma.vmem_to_hbm [thread:$0]  %s214, 128, %s5, [#allocation3]
    $region25: #{tpu_custom_call.1} parent=1 // pred_fallthru
      _
    // Predicated region
    $region26: #{tpu_custom_call.1} parent=1 // pred_check
      _
    $region27: #{tpu_custom_call.1} parent=1 // pred_check_branch
      %218 = sbr.rel (0) target = $region29
    $region28: #{tpu_custom_call.1} parent=1 // pred_region
      %219 = dma.done [#allocation3], 128
    $region29: #{tpu_custom_call.1} parent=1 // pred_fallthru
      _
    %220 = vsyncpa [#allocation3], 1

// kernel: tpu_custom_call.1
$region0: #{tpu_custom_call.1}
  #allocation0 [shape = 'u32[]', space=smem, size = 0x4, offset = 0x4, fixed_abs, tag = 'smem constant byte address 0x4 - core index']
  #allocation1 [shape = 'u32[144,128]{1,0:T(1,128)}', space=vmem, size = 0x12000, scoped, tag = 'internal scratch']
  %s0 = inlined_call_operand.vmem [shape: f32[8,16], index: 0, kind: input, shape index: {}]
  %s1 = inlined_call_operand.vmem [shape: f32[16,128], index: 1, kind: input, shape index: {}]
  %s2 = inlined_call_operand.vmem [shape: f32[1,128], index: 2, kind: input, shape index: {}]
  %s3 = inlined_call_operand.vmem [shape: f32[128,32], index: 3, kind: input, shape index: {}]
  %s4 = inlined_call_operand.vmem [shape: f32[1,32], index: 4, kind: input, shape index: {}]
  %s5 = inlined_call_operand.hbm [shape: f32[8,32], index: 5, kind: output, shape index: {}]
  %s6 = sld [smem:[#allocation0]]
  $region30: #{tpu_custom_call.1} parent=0
    _
  %s8 = ssub.s32 1, %s6
  %s9 = scalar_select 0, %s8, %s6
  $region1: #{tpu_custom_call.1} parent=0
    #allocation2 [shape = 'u8[4096]{0}', space=vmem, size = 0x1000, scoped, tag = 'output window, operand 0, single buffered']
    #allocation3 [shape = 's32[1]{0}', space=sflag, size = 0x4, scoped, tag = 'scoped memory for tpu_custom_call.1']
    %10 = vsyncpa [#allocation3], 0
    // Predicated region
    $region2: #{tpu_custom_call.1} parent=1 // pred_check
      _
    $region3: #{tpu_custom_call.1} parent=1 // pred_check_branch
      %12 = sbr.rel (0) target = $region5
    $region4: #{tpu_custom_call.1} parent=1 // pred_region
      _
    $region5: #{tpu_custom_call.1} parent=1 // pred_fallthru
      _
    // Predicated region
    $region6: #{tpu_custom_call.1} parent=1 // pred_check
      _
    $region7: #{tpu_custom_call.1} parent=1 // pred_check_branch
      %14 = sbr.rel (0) target = $region9
    $region8: #{tpu_custom_call.1} parent=1 // pred_region
      _
    $region9: #{tpu_custom_call.1} parent=1 // pred_fallthru
      _
    // Predicated region
    $region10: #{tpu_custom_call.1} parent=1 // pred_check
      _
    $region11: #{tpu_custom_call.1} parent=1 // pred_check_branch
      %16 = sbr.rel (0) target = $region13
    $region12: #{tpu_custom_call.1} parent=1 // pred_region
      _
    $region13: #{tpu_custom_call.1} parent=1 // pred_fallthru
      _
    // Predicated region
    $region14: #{tpu_custom_call.1} parent=1 // pred_check
      _
    $region15: #{tpu_custom_call.1} parent=1 // pred_check_branch
      %18 = sbr.rel (0) target = $region17
    $region16: #{tpu_custom_call.1} parent=1 // pred_region
      _
    $region17: #{tpu_custom_call.1} parent=1 // pred_fallthru
      _
    // Predicated region
    $region18: #{tpu_custom_call.1} parent=1 // pred_check
      _
    $region19: #{tpu_custom_call.1} parent=1 // pred_check_branch
      %20 = sbr.rel (0) target = $region21
    $region20: #{tpu_custom_call.1} parent=1 // pred_region
      _
    $region21: #{tpu_custom_call.1} parent=1 // pred_fallthru
      _
    %v21 = vld [vmem:[%s0] sm:$0xff]
    %v22 = vld [vmem:[%s1] sm:$0xff]
    %v23 = vld [vmem:[%s1 + $0x8] sm:$0xff]
    %v24 = vld [vmem:[%s2] sm:$0x1]
    %v26 = vlaneseq
    %v27 = vshrl.u32 %v26, 7
    %v28 = vsub.s32 0, %v27
    %v29 = vrot.slane %v24, %v28
    %vm31 = vcmask 130048
    %v33 = vsel %vm31, %v21, 0
    %35 = vmatprep.subr.mxu0 0.0
    %36 = vmatpush1.msra.mxu0 %v22
    %37 = vmatprep.subr.mxu0 0.0
    %38 = vmatpush1.msra.mxu0 %v23
    %39 = vmatprep.subr.mxu0 0.0
    %40 = vmatpush1.msra.mxu0 0.0
    %41 = vmatprep.subr.mxu0 0.0
    %42 = vmatpush1.msra.mxu0 0.0
    %43 = vmatprep.subr.mxu0 0.0
    %44 = vmatpush1.msra.mxu0 0.0
    %45 = vmatprep.subr.mxu0 0.0
    %46 = vmatpush1.msra.mxu0 0.0
    %47 = vmatprep.subr.mxu0 0.0
    %48 = vmatpush1.msra.mxu0 0.0
    %49 = vmatprep.subr.mxu0 0.0
    %50 = vmatpush1.msra.mxu0 0.0
    %51 = vmatprep.subr.mxu0 0.0
    %52 = vmatpush1.msra.mxu0 0.0
    %53 = vmatprep.subr.mxu0 0.0
    %54 = vmatpush1.msra.mxu0 0.0
    %55 = vmatprep.subr.mxu0 0.0
    %56 = vmatpush1.msra.mxu0 0.0
    %57 = vmatprep.subr.mxu0 0.0
    %58 = vmatpush1.msra.mxu0 0.0
    %59 = vmatprep.subr.mxu0 0.0
    %60 = vmatpush1.msra.mxu0 0.0
    %61 = vmatprep.subr.mxu0 0.0
    %62 = vmatpush1.msra.mxu0 0.0
    %63 = vmatprep.subr.mxu0 0.0
    %64 = vmatpush1.msra.mxu0 0.0
    %65 = vmatprep.subr.mxu0 0.0
    %66 = vmatpush1.msra.mxu0 0.0
    %67 = vmatprep.subr.mxu0 0.0
    %68 = vmatpush1.msra.mxu0 0.0
    %69 = vmatprep.subr.mxu0 0.0
    %70 = vmatpush1.msra.mxu0 0.0
    %71 = vmatprep.subr.mxu0 0.0
    %72 = vmatpush1.msra.mxu0 0.0
    %73 = vmatprep.subr.mxu0 0.0
    %74 = vmatpush1.msra.mxu0 0.0
    %75 = vmatprep.subr.mxu0 0.0
    %76 = vmatpush1.msra.mxu0 0.0
    %77 = vmatprep.subr.mxu0 0.0
    %78 = vmatpush1.msra.mxu0 0.0
    %79 = vmatprep.subr.mxu0 0.0
    %80 = vmatpush1.msra.mxu0 0.0
    %81 = vmatprep.subr.mxu0 0.0
    %82 = vmatpush1.msra.mxu0 0.0
    %83 = vmatprep.subr.mxu0 0.0
    %84 = vmatpush1.msra.mxu0 0.0
    %85 = vmatprep.subr.mxu0 0.0
    %86 = vmatpush1.msra.mxu0 0.0
    %87 = vmatprep.subr.mxu0 0.0
    %88 = vmatpush1.msra.mxu0 0.0
    %89 = vmatprep.subr.mxu0 0.0
    %90 = vmatpush1.msra.mxu0 0.0
    %91 = vmatprep.subr.mxu0 0.0
    %92 = vmatpush1.msra.mxu0 0.0
    %93 = vmatprep.subr.mxu0 0.0
    %94 = vmatpush1.msra.mxu0 0.0
    %95 = vmatprep.subr.mxu0 0.0
    %96 = vmatpush1.msra.mxu0 0.0
    %97 = vmatprep.subr.mxu0 0.0
    %98 = vmatpush1.msra.mxu0 0.0
    %99 = vmatprep.mubr.f32.mxu0 0.0
    %100 = vmatmul.mubr.f32.gmra.mrb[0].mxu0 %v33
    %v101 = vpop.f32.mrb[0].mxu0
    %v102 = vadd.f32 %v29, %v101
    %v103 = vpop.f32.mrb[0].mxu0
    %104 = vdwg.mxu0
    %v105 = vmax.f32 %v102, 0.0
    %v106 = vld [vmem:[%s3] sm:$0xff]
    %v107 = vld [vmem:[%s3 + $0x8] sm:$0xff]
    %v108 = vld [vmem:[%s3 + $0x10] sm:$0xff]
    %v109 = vld [vmem:[%s3 + $0x18] sm:$0xff]
    %v110 = vld [vmem:[%s3 + $0x20] sm:$0xff]
    %v111 = vld [vmem:[%s3 + $0x28] sm:$0xff]
    %v112 = vld [vmem:[%s3 + $0x30] sm:$0xff]
    %v113 = vld [vmem:[%s3 + $0x38] sm:$0xff]
    %v114 = vld [vmem:[%s3 + $0x40] sm:$0xff]
    %v115 = vld [vmem:[%s3 + $0x48] sm:$0xff]
    %v116 = vld [vmem:[%s3 + $0x50] sm:$0xff]
    %v117 = vld [vmem:[%s3 + $0x58] sm:$0xff]
    %v118 = vld [vmem:[%s3 + $0x60] sm:$0xff]
    %v119 = vld [vmem:[%s3 + $0x68] sm:$0xff]
    %v120 = vld [vmem:[%s3 + $0x70] sm:$0xff]
    %v121 = vld [vmem:[%s3 + $0x78] sm:$0xff]
    %v122 = vld [vmem:[%s4] sm:$0x1]
    %v124 = vlaneseq
    %v125 = vshrl.u32 %v124, 7
    %v126 = vsub.s32 0, %v125
    %v127 = vrot.slane %v122, %v126
    %129 = vmatprep.subr.mxu0 0.0
    %130 = vmatpush1.msra.mxu0 %v106
    %131 = vmatprep.subr.mxu0 0.0
    %132 = vmatpush1.msra.mxu0 %v107
    %133 = vmatprep.subr.mxu0 0.0
    %134 = vmatpush1.msra.mxu0 %v108
    %135 = vmatprep.subr.mxu0 0.0
    %136 = vmatpush1.msra.mxu0 %v109
    %137 = vmatprep.subr.mxu0 0.0
    %138 = vmatpush1.msra.mxu0 %v110
    %139 = vmatprep.subr.mxu0 0.0
    %140 = vmatpush1.msra.mxu0 %v111
    %141 = vmatprep.subr.mxu0 0.0
    %142 = vmatpush1.msra.mxu0 %v112
    %143 = vmatprep.subr.mxu0 0.0
    %144 = vmatpush1.msra.mxu0 %v113
    %145 = vmatprep.subr.mxu0 0.0
    %146 = vmatpush1.msra.mxu0 %v114
    %147 = vmatprep.subr.mxu0 0.0
    %148 = vmatpush1.msra.mxu0 %v115
    %149 = vmatprep.subr.mxu0 0.0
    %150 = vmatpush1.msra.mxu0 %v116
    %151 = vmatprep.subr.mxu0 0.0
    %152 = vmatpush1.msra.mxu0 %v117
    %153 = vmatprep.subr.mxu0 0.0
    %154 = vmatpush1.msra.mxu0 %v118
    %155 = vmatprep.subr.mxu0 0.0
    %156 = vmatpush1.msra.mxu0 %v119
    %157 = vmatprep.subr.mxu0 0.0
    %158 = vmatpush1.msra.mxu0 %v120
    %159 = vmatprep.subr.mxu0 0.0
    %160 = vmatpush1.msra.mxu0 %v121
    %161 = vmatprep.subr.mxu0 0.0
    %162 = vmatpush1.msra.mxu0 0.0
    %163 = vmatprep.subr.mxu0 0.0
    %164 = vmatpush1.msra.mxu0 0.0
    %165 = vmatprep.subr.mxu0 0.0
    %166 = vmatpush1.msra.mxu0 0.0
    %167 = vmatprep.subr.mxu0 0.0
    %168 = vmatpush1.msra.mxu0 0.0
    %169 = vmatprep.subr.mxu0 0.0
    %170 = vmatpush1.msra.mxu0 0.0
    %171 = vmatprep.subr.mxu0 0.0
    %172 = vmatpush1.msra.mxu0 0.0
    %173 = vmatprep.subr.mxu0 0.0
    %174 = vmatpush1.msra.mxu0 0.0
    %175 = vmatprep.subr.mxu0 0.0
    %176 = vmatpush1.msra.mxu0 0.0
    %177 = vmatprep.subr.mxu0 0.0
    %178 = vmatpush1.msra.mxu0 0.0
    %179 = vmatprep.subr.mxu0 0.0
    %180 = vmatpush1.msra.mxu0 0.0
    %181 = vmatprep.subr.mxu0 0.0
    %182 = vmatpush1.msra.mxu0 0.0
    %183 = vmatprep.subr.mxu0 0.0
    %184 = vmatpush1.msra.mxu0 0.0
    %185 = vmatprep.subr.mxu0 0.0
    %186 = vmatpush1.msra.mxu0 0.0
    %187 = vmatprep.subr.mxu0 0.0
    %188 = vmatpush1.msra.mxu0 0.0
    %189 = vmatprep.subr.mxu0 0.0
    %190 = vmatpush1.msra.mxu0 0.0
    %191 = vmatprep.subr.mxu0 0.0
    %192 = vmatpush1.msra.mxu0 0.0
    %193 = vmatprep.mubr.f32.mxu0 0.0
    %194 = vmatmul.mubr.f32.gmra.mrb[0].mxu0 %v105
    %v195 = vpop.f32.mrb[0].mxu0
    %v196 = vadd.f32 %v127, %v195
    %v197 = vpop.f32.mrb[0].mxu0
    %198 = vdwg.mxu0
    %v199 = vxor.u32 %v196, 2147483648
    %v200 = vmul.f32 %v199, 1.442695
    %v201 = vpow.pop %v200
    %v202 = vadd.f32 %v201, 1.0
    %v203 = vrcp.pop %v202
    %v204 = vmul.f32 1.0, %v203
    %vm205 = vcmask 261120
    %206 = vst.msk [vmem:[#allocation2] sm:$0xff] %vm205, %v204
    // Predicated region
    $region22: #{tpu_custom_call.1} parent=1 // pred_check
      _
    $region23: #{tpu_custom_call.1} parent=1 // pred_check_branch
      %208 = sbr.rel (0) target = $region25
    $region24: #{tpu_custom_call.1} parent=1 // pred_region
      %s210 = ssub.s32 128, 128
      %211 = vsyncadd [#allocation3], %s210
      %s213 = sshll.u32 [#allocation2], 4
      %s214 = int_to_ptr.vmem [resolvable:$true] %s213
      %216 = dma.vmem_to_hbm [thread:$0]  %s214, 128, %s5, [#allocation3]
    $region25: #{tpu_custom_call.1} parent=1 // pred_fallthru
      _
    // Predicated region
    $region26: #{tpu_custom_call.1} parent=1 // pred_check
      _
    $region27: #{tpu_custom_call.1} parent=1 // pred_check_branch
      %218 = sbr.rel (0) target = $region29
    $region28: #{tpu_custom_call.1} parent=1 // pred_region
      %219 = dma.done [#allocation3], 128
    $region29: #{tpu_custom_call.1} parent=1 // pred_fallthru
      _
    %220 = vsyncpa [#allocation3], 1

</llo_original>
